<compile_context>
chip_gen: v5e
topology: v5e:2x2
jax: 0.10.0
libtpu: 0.0.40
codegen_flags: <defaults>
</compile_context>

<pallas_src>
import functools
import math

import jax
import jax.numpy as jnp
from jax import lax
from jax.experimental import pallas as pl
from jax.experimental.pallas import tpu as pltpu


def _round_up(x: int, m: int) -> int:
    return ((x + m - 1) // m) * m


def cluster_attention_kernel(x_ref, qk_ref, vo_ref, seg_ref, gamma_ref, beta_ref,
                             out_ref, attn_ref, *, eps: float):
    """One tile of flattened (batch*seq) token rows.

    x_ref    : (tR, D)      token tile (compute dtype)
    qk_ref   : (D, HCp)     fused W_Q^T @ blockdiag(K^T) * 1/sqrt(d_k), lane-padded
    vo_ref   : (HCp, D)     fused per-head V_h @ W_O_h (pad rows are zero)
    seg_ref  : (HCp, HCp)   same-head indicator matrix, f32
    gamma/beta: (1, D)      LayerNorm affine parameters
    out_ref  : (tR, D)
    attn_ref : (tR, HCp)    lane-dense attention probabilities
    """
    x = x_ref[...]

    # All heads' attention scores in a single MXU matmul (Q projection + scale folded).
    scores = jnp.dot(x, qk_ref[...], preferred_element_type=jnp.float32)   # (tR, HCp) f32

    # Segmented (per-head) softmax over the lane axis.  Row-global max subtraction is
    # exact per head (pad columns duplicate a real column so they never raise the max);
    # the denominator clamp guards the rare full-underflow case against inf/NaN.
    m = jnp.max(scores, axis=-1, keepdims=True)
    e = jnp.exp(scores - m)                                                 # (tR, HCp)
    denom = jnp.dot(e, seg_ref[...], preferred_element_type=jnp.float32)    # per-head sums
    denom = jnp.maximum(denom, jnp.float32(1e-30))
    p = e * pl.reciprocal(denom, approx=True)

    attn_ref[...] = p.astype(attn_ref.dtype)   # full-lane-width (unmasked) store

    # context @ W_O with V and W_O pre-fused per head: one (tR,HCp)x(HCp,D) matmul.
    enhanced = jnp.dot(p.astype(vo_ref.dtype), vo_ref[...],
                       preferred_element_type=jnp.float32)                  # (tR, D) f32

    # Residual + LayerNorm in f32 (eps matches the PyTorch default 1e-5).
    resid = x.astype(jnp.float32) + enhanced
    mean = jnp.mean(resid, axis=-1, keepdims=True)
    var = jnp.mean((resid - mean) ** 2, axis=-1, keepdims=True)
    normed = (resid - mean) * lax.rsqrt(var + eps)
    out = normed * gamma_ref[0].astype(jnp.float32) + beta_ref[0].astype(jnp.float32)
    out_ref[...] = out.astype(out_ref.dtype)


def _pick_row_tile(n_rows: int, bytes_per_row: int) -> int:
    """Row tile: as large as possible (<=1024 rows, <=~4 MiB per buffer), multiple of 8."""
    rows_full = _round_up(n_rows, 8)
    if rows_full <= 1024 and rows_full * bytes_per_row <= (4 << 20):
        return rows_full
    cap = ((4 << 20) // max(bytes_per_row, 1)) // 8 * 8
    return int(max(8, min(1024, cap)))


def cluster_attention(hidden_states, cluster_embeddings,
                      w_q, w_k, w_v, w_o, ln_gamma, ln_beta, *,
                      n_heads: int, compute_dtype=None, eps: float = 1e-5):
    """hidden_states: [B,S,D]; weights in PyTorch [out,in] = [D,D] layout.

    Returns (output [B,S,D], attention_weights [B,H,S,C]) matching the PyTorch module.
    `compute_dtype` (e.g. jnp.bfloat16) controls the MXU-operand / attn-writeback dtype.
    """
    B, S, D = hidden_states.shape
    C = cluster_embeddings.shape[0]
    if D % n_heads != 0:
        raise ValueError(f"d_model ({D}) must be divisible by n_heads ({n_heads})")
    d_k = D // n_heads
    HC = n_heads * C
    cd = jnp.dtype(compute_dtype) if compute_dtype is not None else hidden_states.dtype
    f32 = jnp.float32

    # ---- batch-invariant precompute (tiny, pure XLA; keeps the kernel HBM-bound) ----
    emb = cluster_embeddings.astype(f32)
    K = jnp.einsum("cd,od->co", emb, w_k.astype(f32))                 # emb @ W_K^T  (C,D)
    V = jnp.einsum("cd,od->co", emb, w_v.astype(f32))                 # emb @ W_V^T  (C,D)
    inv_temp = 1.0 / math.sqrt(d_k)

    # Block-diagonal per-head K^T with the 1/sqrt(d_k) scale folded in: (D, H*C).
    KT_heads = jnp.transpose(K.reshape(C, n_heads, d_k), (1, 2, 0)) * inv_temp   # (H,dk,C)
    eye_h = jnp.eye(n_heads, dtype=f32)
    KT_bd = jnp.einsum("hdc,hg->hdgc", KT_heads, eye_h).reshape(D, HC)

    # Fold W_Q in: scores = (x @ W_Q^T) @ KT_bd = x @ (W_Q^T @ KT_bd).
    QK = jnp.einsum("oi,oc->ic", w_q.astype(f32), KT_bd)              # (D, HC)

    # Per-head V_h @ W_O_h stacked: (H*C, D).
    V_heads = V.reshape(C, n_heads, d_k)
    w_o_r = w_o.astype(f32).reshape(D, n_heads, d_k)
    VO = jnp.einsum("chd,ohd->hco", V_heads, w_o_r).reshape(HC, D)

    # Lane-pad the head*cluster axis to a multiple of 128: pad score columns replicate
    # the last real column (row max unchanged), pad VO rows are zero (no output
    # contribution), pad lanes form their own softmax segments (always finite).
    HCp = max(128, _round_up(HC, 128))
    pad = HCp - HC
    QKp = jnp.pad(QK, ((0, 0), (0, pad)), mode="edge") if pad else QK
    VOp = jnp.pad(VO, ((0, pad), (0, 0))) if pad else VO
    head_idx = jnp.concatenate([jnp.arange(HC) // C, n_heads + jnp.arange(pad)])
    seg = (head_idx[:, None] == head_idx[None, :]).astype(f32)        # (HCp, HCp)

    # ---- flatten batch*seq into large row tiles ----
    R = B * S
    x2 = hidden_states.reshape(R, D).astype(cd)
    tR = _pick_row_tile(R, D * x2.dtype.itemsize)
    Rp = _round_up(R, tR)
    if Rp > R:
        x2 = jnp.pad(x2, ((0, Rp - R), (0, 0)))
    n_tiles = Rp // tR

    kernel = functools.partial(cluster_attention_kernel, eps=eps)
    out_shapes = (
        jax.ShapeDtypeStruct((Rp, D), hidden_states.dtype),
        jax.ShapeDtypeStruct((Rp, HCp), cd),                          # lane-dense attn
    )
    grid_spec = pltpu.PrefetchScalarGridSpec(
        num_scalar_prefetch=0,
        grid=(n_tiles,),
        in_specs=[
            pl.BlockSpec((tR, D), lambda r: (r, 0)),                  # token rows
            pl.BlockSpec((D, HCp), lambda r: (0, 0)),                 # fused Q*K^T weight
            pl.BlockSpec((HCp, D), lambda r: (0, 0)),                 # fused V*W_O weight
            pl.BlockSpec((HCp, HCp), lambda r: (0, 0)),               # segment indicator
            pl.BlockSpec((1, D), lambda r: (0, 0)),                   # LN gamma
            pl.BlockSpec((1, D), lambda r: (0, 0)),                   # LN beta
        ],
        out_specs=[
            pl.BlockSpec((tR, D), lambda r: (r, 0)),
            pl.BlockSpec((tR, HCp), lambda r: (r, 0)),
        ],
    )
    out2, attn2 = pl.pallas_call(
        kernel,
        out_shape=out_shapes,
        grid_spec=grid_spec,
        compiler_params=pltpu.CompilerParams(
            dimension_semantics=("parallel",),           # megacore-shard the row tiles
            vmem_limit_bytes=48 * 1024 * 1024,           # <= v7x 64 MiB with headroom
        ),
    )(x2, QKp.astype(cd), VOp.astype(cd), seg,
      ln_gamma.reshape(1, D), ln_beta.reshape(1, D))

    out = out2[:R].reshape(B, S, D)
    attn = (attn2[:R, :HC].astype(hidden_states.dtype)
            .reshape(B, S, n_heads, C).transpose(0, 2, 1, 3))
    return out, attn


def _reference(hidden_states, cluster_embeddings, w_q, w_k, w_v, w_o,
               ln_gamma, ln_beta, n_heads):
    """Pure-JAX reference mirroring the PyTorch forward (dropout = identity)."""
    B, S, D = hidden_states.shape
    C = cluster_embeddings.shape[0]
    d_k = D // n_heads
    Q = hidden_states @ w_q.T
    K = jnp.broadcast_to(cluster_embeddings @ w_k.T, (B, C, D))
    V = jnp.broadcast_to(cluster_embeddings @ w_v.T, (B, C, D))
    Q = Q.reshape(B, S, n_heads, d_k).transpose(0, 2, 1, 3)
    K = K.reshape(B, C, n_heads, d_k).transpose(0, 2, 1, 3)
    V = V.reshape(B, C, n_heads, d_k).transpose(0, 2, 1, 3)
    scores = jnp.einsum("bhsd,bhcd->bhsc", Q, K) / math.sqrt(d_k)
    attn = jax.nn.softmax(scores, axis=-1)
    ctx = jnp.einsum("bhsc,bhcd->bhsd", attn, V)
    ctx = ctx.transpose(0, 2, 1, 3).reshape(B, S, D)
    enhanced = ctx @ w_o.T
    resid = hidden_states + enhanced
    mean = resid.mean(-1, keepdims=True)
    var = ((resid - mean) ** 2).mean(-1, keepdims=True)
    out = (resid - mean) / jnp.sqrt(var + 1e-5) * ln_gamma + ln_beta
    return out, attn


if __name__ == "__main__":
    B, S, D = 2, 8, 32
    n_heads = 8
    n_clusters = 4

    key = jax.random.PRNGKey(0)
    k_x, k_emb, k_q, k_k, k_v, k_o = jax.random.split(key, 6)

    # deterministic parameter init matching the module's __init__/_init_weights
    xavier_limit = math.sqrt(6.0 / (D + D))
    w_q = jax.random.uniform(k_q, (D, D), jnp.float32, -xavier_limit, xavier_limit)
    w_k = jax.random.uniform(k_k, (D, D), jnp.float32, -xavier_limit, xavier_limit)
    w_v = jax.random.uniform(k_v, (D, D), jnp.float32, -xavier_limit, xavier_limit)
    w_o = jax.random.uniform(k_o, (D, D), jnp.float32, -xavier_limit, xavier_limit)
    cluster_emb = jax.random.normal(k_emb, (n_clusters, D), jnp.float32) * 0.02
    ln_gamma = jnp.ones((D,), jnp.float32)
    ln_beta = jnp.zeros((D,), jnp.float32)

    x = jax.random.normal(k_x, (B, S, D), jnp.float32)

    ref_out, ref_attn = _reference(x, cluster_emb, w_q, w_k, w_v, w_o,
                                   ln_gamma, ln_beta, n_heads)

    # --- default (f32) path ---
    out, attn = cluster_attention(x, cluster_emb, w_q, w_k, w_v, w_o,
                                  ln_gamma, ln_beta, n_heads=n_heads)
    out = jax.block_until_ready(out)
    attn = jax.block_until_ready(attn)
    assert out.shape == (B, S, D)
    assert attn.shape == (B, n_heads, S, n_clusters)
    assert jnp.allclose(out, ref_out, atol=2e-3, rtol=2e-3)
    assert jnp.allclose(attn, ref_attn, atol=2e-3, rtol=2e-3)

    # --- bf16 compute/IO path (perf feedback): looser tolerance ---
    out_bf, attn_bf = cluster_attention(x, cluster_emb, w_q, w_k, w_v, w_o,
                                        ln_gamma, ln_beta, n_heads=n_heads,
                                        compute_dtype=jnp.bfloat16)
    out_bf = jax.block_until_ready(out_bf)
    attn_bf = jax.block_until_ready(attn_bf)
    assert jnp.allclose(out_bf, ref_out, atol=1e-1, rtol=1e-1)
    assert jnp.allclose(attn_bf, ref_attn, atol=3e-2, rtol=3e-2)

    print("KERNEL_OK")
</pallas_src>

<mosaic_0001>
module attributes {stable_mosaic.version = 11 : i64} {
  func.func @cluster_attention_kernel(%arg0: i32, %arg1: memref<16x32xf32, #tpu.memory_space<vmem>>, %arg2: memref<32x128xf32, #tpu.memory_space<vmem>>, %arg3: memref<128x32xf32, #tpu.memory_space<vmem>>, %arg4: memref<128x128xf32, #tpu.memory_space<vmem>>, %arg5: memref<1x32xf32, #tpu.memory_space<vmem>>, %arg6: memref<1x32xf32, #tpu.memory_space<vmem>>, %arg7: memref<16x32xf32, #tpu.memory_space<vmem>>, %arg8: memref<16x128xf32, #tpu.memory_space<vmem>>) attributes {dimension_semantics = [#tpu.dimension_semantics<parallel>], iteration_bounds = array<i64: 1>, scalar_prefetch = 0 : i64, scratch_operands = 0 : i64, tpu.core_type = #tpu.core_type<tc>, window_params = [{transform_indices = @transform_0, window_bounds = array<i64: 16, 32>}, {pipeline_mode = #tpu.pipeline_mode<synchronous>, transform_indices = @transform_1, window_bounds = array<i64: 32, 128>}, {pipeline_mode = #tpu.pipeline_mode<synchronous>, transform_indices = @transform_2, window_bounds = array<i64: 128, 32>}, {pipeline_mode = #tpu.pipeline_mode<synchronous>, transform_indices = @transform_3, window_bounds = array<i64: 128, 128>}, {pipeline_mode = #tpu.pipeline_mode<synchronous>, transform_indices = @transform_4, window_bounds = array<i64: 1, 32>}, {pipeline_mode = #tpu.pipeline_mode<synchronous>, transform_indices = @transform_5, window_bounds = array<i64: 1, 32>}, {transform_indices = @transform_6, window_bounds = array<i64: 16, 32>}, {transform_indices = @transform_7, window_bounds = array<i64: 16, 128>}]} {
    %c0 = arith.constant 0 : index
    %c0_0 = arith.constant 0 : index
    %0 = vector.load %arg1[%c0, %c0_0] : memref<16x32xf32, #tpu.memory_space<vmem>>, vector<16x32xf32>
    %c0_1 = arith.constant 0 : index
    %c0_2 = arith.constant 0 : index
    %1 = vector.load %arg2[%c0_1, %c0_2] : memref<32x128xf32, #tpu.memory_space<vmem>>, vector<32x128xf32>
    %cst = arith.constant dense<0.000000e+00> : vector<16x128xf32>
    %2 = tpu.matmul %0, %1, %cst {dimension_numbers = #tpu.dot_dimension_numbers<[1], [0], [0], [1], [0, 0, 1, 1], [], []>} : vector<16x32xf32>, vector<32x128xf32>, vector<16x128xf32> -> vector<16x128xf32>
    %cst_3 = arith.constant dense<0xFF800000> : vector<16xf32>
    %3 = vector.multi_reduction <maximumf>, %2, %cst_3 [1] : vector<16x128xf32> to vector<16xf32>
    %4 = vector.shape_cast %3 : vector<16xf32> to vector<16x1xf32>
    %5 = vector.broadcast %4 : vector<16x1xf32> to vector<16x128xf32>
    %6 = arith.subf %2, %5 : vector<16x128xf32>
    %7 = math.exp %6 : vector<16x128xf32>
    %c0_4 = arith.constant 0 : index
    %c0_5 = arith.constant 0 : index
    %8 = vector.load %arg4[%c0_4, %c0_5] : memref<128x128xf32, #tpu.memory_space<vmem>>, vector<128x128xf32>
    %cst_6 = arith.constant dense<0.000000e+00> : vector<16x128xf32>
    %9 = tpu.matmul %7, %8, %cst_6 {dimension_numbers = #tpu.dot_dimension_numbers<[1], [0], [0], [1], [0, 0, 1, 1], [], []>} : vector<16x128xf32>, vector<128x128xf32>, vector<16x128xf32> -> vector<16x128xf32>
    %cst_7 = arith.constant 1.000000e-30 : f32
    %10 = vector.broadcast %cst_7 : f32 to vector<16x128xf32>
    %11 = arith.maximumf %9, %10 : vector<16x128xf32>
    %12 = tpu.reciprocal %11 {approx = true} : vector<16x128xf32> -> vector<16x128xf32>
    %13 = arith.mulf %7, %12 : vector<16x128xf32>
    %c0_8 = arith.constant 0 : index
    %c0_9 = arith.constant 0 : index
    %14 = vector.load %arg8[%c0_8, %c0_9] : memref<16x128xf32, #tpu.memory_space<vmem>>, vector<16x128xf32>
    tpu.vector_store %arg8[%c0_8, %c0_9], %13 {strides = array<i32>} : memref<16x128xf32, #tpu.memory_space<vmem>>, vector<16x128xf32>,
    %c0_10 = arith.constant 0 : index
    %c0_11 = arith.constant 0 : index
    %15 = vector.load %arg3[%c0_10, %c0_11] : memref<128x32xf32, #tpu.memory_space<vmem>>, vector<128x32xf32>
    %cst_12 = arith.constant dense<0.000000e+00> : vector<16x32xf32>
    %16 = tpu.matmul %13, %15, %cst_12 {dimension_numbers = #tpu.dot_dimension_numbers<[1], [0], [0], [1], [0, 0, 1, 1], [], []>} : vector<16x128xf32>, vector<128x32xf32>, vector<16x32xf32> -> vector<16x32xf32>
    %17 = arith.addf %0, %16 : vector<16x32xf32>
    %cst_13 = arith.constant dense<0.000000e+00> : vector<16xf32>
    %18 = vector.multi_reduction <add>, %17, %cst_13 [1] : vector<16x32xf32> to vector<16xf32>
    %19 = vector.shape_cast %18 : vector<16xf32> to vector<16x1xf32>
    %cst_14 = arith.constant 3.200000e+01 : f32
    %20 = vector.broadcast %cst_14 : f32 to vector<16x1xf32>
    %21 = arith.divf %19, %20 : vector<16x1xf32>
    %22 = vector.broadcast %21 : vector<16x1xf32> to vector<16x32xf32>
    %23 = arith.subf %17, %22 : vector<16x32xf32>
    %24 = arith.mulf %23, %23 : vector<16x32xf32>
    %cst_15 = arith.constant dense<0.000000e+00> : vector<16xf32>
    %25 = vector.multi_reduction <add>, %24, %cst_15 [1] : vector<16x32xf32> to vector<16xf32>
    %26 = vector.shape_cast %25 : vector<16xf32> to vector<16x1xf32>
    %cst_16 = arith.constant 3.200000e+01 : f32
    %27 = vector.broadcast %cst_16 : f32 to vector<16x1xf32>
    %28 = arith.divf %26, %27 : vector<16x1xf32>
    %29 = vector.broadcast %21 : vector<16x1xf32> to vector<16x32xf32>
    %30 = arith.subf %17, %29 : vector<16x32xf32>
    %cst_17 = arith.constant 9.99999974E-6 : f32
    %31 = vector.broadcast %cst_17 : f32 to vector<16x1xf32>
    %32 = arith.addf %28, %31 : vector<16x1xf32>
    %33 = math.rsqrt %32 : vector<16x1xf32>
    %34 = vector.broadcast %33 : vector<16x1xf32> to vector<16x32xf32>
    %35 = arith.mulf %30, %34 : vector<16x32xf32>
    %c0_18 = arith.constant 0 : index
    %c0_19 = arith.constant 0 : index
    %36 = vector.load %arg5[%c0_18, %c0_19] : memref<1x32xf32, #tpu.memory_space<vmem>>, vector<1x32xf32>
    %37 = vector.shape_cast %36 : vector<1x32xf32> to vector<32xf32>
    %38 = vector.shape_cast %37 : vector<32xf32> to vector<1x32xf32>
    %39 = vector.broadcast %38 : vector<1x32xf32> to vector<16x32xf32>
    %40 = arith.mulf %35, %39 : vector<16x32xf32>
    %c0_20 = arith.constant 0 : index
    %c0_21 = arith.constant 0 : index
    %41 = vector.load %arg6[%c0_20, %c0_21] : memref<1x32xf32, #tpu.memory_space<vmem>>, vector<1x32xf32>
    %42 = vector.shape_cast %41 : vector<1x32xf32> to vector<32xf32>
    %43 = vector.shape_cast %42 : vector<32xf32> to vector<1x32xf32>
    %44 = vector.broadcast %43 : vector<1x32xf32> to vector<16x32xf32>
    %45 = arith.addf %40, %44 : vector<16x32xf32>
    %c0_22 = arith.constant 0 : index
    %c0_23 = arith.constant 0 : index
    %46 = vector.load %arg7[%c0_22, %c0_23] : memref<16x32xf32, #tpu.memory_space<vmem>>, vector<16x32xf32>
    tpu.vector_store %arg7[%c0_22, %c0_23], %45 {strides = array<i32>} : memref<16x32xf32, #tpu.memory_space<vmem>>, vector<16x32xf32>,
    return
  }
  func.func @transform_0(%arg0: i32) -> (i32, i32) {
    %c0_i32 = arith.constant 0 : i32
    %c0_i32_0 = arith.constant 0 : i32
    return %arg0, %c0_i32 : i32, i32
  }
  func.func @transform_1(%arg0: i32) -> (i32, i32) {
    %c0_i32 = arith.constant 0 : i32
    %c0_i32_0 = arith.constant 0 : i32
    %c0_i32_1 = arith.constant 0 : i32
    return %c0_i32, %c0_i32_0 : i32, i32
  }
  func.func @transform_2(%arg0: i32) -> (i32, i32) {
    %c0_i32 = arith.constant 0 : i32
    %c0_i32_0 = arith.constant 0 : i32
    %c0_i32_1 = arith.constant 0 : i32
    return %c0_i32, %c0_i32_0 : i32, i32
  }
  func.func @transform_3(%arg0: i32) -> (i32, i32) {
    %c0_i32 = arith.constant 0 : i32
    %c0_i32_0 = arith.constant 0 : i32
    %c0_i32_1 = arith.constant 0 : i32
    return %c0_i32, %c0_i32_0 : i32, i32
  }
  func.func @transform_4(%arg0: i32) -> (i32, i32) {
    %c0_i32 = arith.constant 0 : i32
    %c0_i32_0 = arith.constant 0 : i32
    %c0_i32_1 = arith.constant 0 : i32
    return %c0_i32, %c0_i32_0 : i32, i32
  }
  func.func @transform_5(%arg0: i32) -> (i32, i32) {
    %c0_i32 = arith.constant 0 : i32
    %c0_i32_0 = arith.constant 0 : i32
    %c0_i32_1 = arith.constant 0 : i32
    return %c0_i32, %c0_i32_0 : i32, i32
  }
  func.func @transform_6(%arg0: i32) -> (i32, i32) {
    %c0_i32 = arith.constant 0 : i32
    %c0_i32_0 = arith.constant 0 : i32
    return %arg0, %c0_i32 : i32, i32
  }
  func.func @transform_7(%arg0: i32) -> (i32, i32) {
    %c0_i32 = arith.constant 0 : i32
    %c0_i32_0 = arith.constant 0 : i32
    return %arg0, %c0_i32 : i32, i32
  }
}

</mosaic_0001>

<llo_original>
// kernel: tpu_custom_call.1
$region0: #{tpu_custom_call.1}
  #allocation0 [shape = 'u32[]', space=smem, size = 0x4, offset = 0x4, fixed_abs, tag = 'smem constant byte address 0x4 - core index']
  #allocation1 [shape = 'u32[72,128]{1,0:T(1,128)}', space=vmem, size = 0x9000, scoped, tag = 'internal scratch']
  %s0 = inlined_call_operand.hbm [shape: f32[16,32], index: 0, kind: input, shape index: {}]
  %s1 = inlined_call_operand.vmem [shape: f32[32,128], index: 1, kind: input, shape index: {}]
  %s2 = inlined_call_operand.vmem [shape: f32[128,32], index: 2, kind: input, shape index: {}]
  %s3 = inlined_call_operand.vmem [shape: f32[128,128], index: 3, kind: input, shape index: {}]
  %s4 = inlined_call_operand.vmem [shape: f32[1,32], index: 4, kind: input, shape index: {}]
  %s5 = inlined_call_operand.vmem [shape: f32[1,32], index: 5, kind: input, shape index: {}]
  %s6 = inlined_call_operand.hbm [shape: f32[16,32], index: 6, kind: output, shape index: {0}]
  %s7 = inlined_call_operand.hbm [shape: f32[16,128], index: 7, kind: output, shape index: {1}]
  %8 = xla_tuple %s6, %s7
  %s9 = sld [smem:[#allocation0]]
  $region46: #{tpu_custom_call.1} parent=0
    _
  %s11 = ssub.s32 1, %s9
  %s12 = scalar_select 0, %s11, %s9
  $region1: #{tpu_custom_call.1} parent=0
    #allocation2 [shape = 'u8[8192]{0}', space=vmem, size = 0x2000, scoped, tag = 'input window, operand 0, single buffered']
    #allocation3 [shape = 's32[1]{0}', space=sflag, size = 0x4, scoped, tag = 'scoped memory for tpu_custom_call.1']
    #allocation4 [shape = 's32[1]{0}', space=sflag, size = 0x4, scoped, tag = 'scoped memory for tpu_custom_call.1']
    #allocation5 [shape = 'u8[8192]{0}', space=vmem, size = 0x2000, scoped, tag = 'output window, operand 0, single buffered']
    #allocation6 [shape = 'u8[8192]{0}', space=vmem, size = 0x2000, scoped, tag = 'output window, operand 1, single buffered']
    #allocation7 [shape = 's32[1]{0}', space=sflag, size = 0x4, scoped, tag = 'scoped memory for tpu_custom_call.1']
    %13 = vsyncpa [#allocation3], 0
    %14 = vsyncpa [#allocation4], 0
    %15 = vsyncpa [#allocation7], 0
    // Predicated region
    $region2: #{tpu_custom_call.1} parent=1 // pred_check
      _
    $region3: #{tpu_custom_call.1} parent=1 // pred_check_branch
      %17 = sbr.rel (0) target = $region5
    $region4: #{tpu_custom_call.1} parent=1 // pred_region
      %19 = vsyncadd [#allocation3], 0
      %s20 = sshll.u32 %s0, 4
      %s21 = int_to_ptr.hbm [resolvable:$true] %s20
      %s22 = sshll.u32 [#allocation2], 4
      %s23 = int_to_ptr.vmem [resolvable:$true] %s22
      %28 = dma.hbm_to_vmem [thread:$0]  %s21, 256, %s23, [#allocation3], 128, 128, 8
    $region5: #{tpu_custom_call.1} parent=1 // pred_fallthru
      _
    // Predicated region
    $region6: #{tpu_custom_call.1} parent=1 // pred_check
      _
    $region7: #{tpu_custom_call.1} parent=1 // pred_check_branch
      %30 = sbr.rel (0) target = $region9
    $region8: #{tpu_custom_call.1} parent=1 // pred_region
      _
    $region9: #{tpu_custom_call.1} parent=1 // pred_fallthru
      _
    // Predicated region
    $region10: #{tpu_custom_call.1} parent=1 // pred_check
      _
    $region11: #{tpu_custom_call.1} parent=1 // pred_check_branch
      %32 = sbr.rel (0) target = $region13
    $region12: #{tpu_custom_call.1} parent=1 // pred_region
      _
    $region13: #{tpu_custom_call.1} parent=1 // pred_fallthru
      _
    // Predicated region
    $region14: #{tpu_custom_call.1} parent=1 // pred_check
      _
    $region15: #{tpu_custom_call.1} parent=1 // pred_check_branch
      %34 = sbr.rel (0) target = $region17
    $region16: #{tpu_custom_call.1} parent=1 // pred_region
      _
    $region17: #{tpu_custom_call.1} parent=1 // pred_fallthru
      _
    // Predicated region
    $region18: #{tpu_custom_call.1} parent=1 // pred_check
      _
    $region19: #{tpu_custom_call.1} parent=1 // pred_check_branch
      %36 = sbr.rel (0) target = $region21
    $region20: #{tpu_custom_call.1} parent=1 // pred_region
      _
    $region21: #{tpu_custom_call.1} parent=1 // pred_fallthru
      _
    // Predicated region
    $region22: #{tpu_custom_call.1} parent=1 // pred_check
      _
    $region23: #{tpu_custom_call.1} parent=1 // pred_check_branch
      %38 = sbr.rel (0) target = $region25
    $region24: #{tpu_custom_call.1} parent=1 // pred_region
      _
    $region25: #{tpu_custom_call.1} parent=1 // pred_fallthru
      _
    // Predicated region
    $region26: #{tpu_custom_call.1} parent=1 // pred_check
      _
    $region27: #{tpu_custom_call.1} parent=1 // pred_check_branch
      %40 = sbr.rel (0) target = $region29
    $region28: #{tpu_custom_call.1} parent=1 // pred_region
      %42 = dma.done [#allocation3], 256
    $region29: #{tpu_custom_call.1} parent=1 // pred_fallthru
      _
    %v43 = vld [vmem:[#allocation2] sm:$0xff]
    %v44 = vld [vmem:[#allocation2 + $0x8] sm:$0xff]
    %v45 = vld [vmem:[%s1] sm:$0xff]
    %v46 = vld [vmem:[%s1 + $0x8] sm:$0xff]
    %v47 = vld [vmem:[%s1 + $0x10] sm:$0xff]
    %v48 = vld [vmem:[%s1 + $0x18] sm:$0xff]
    %vm49 = vcmask 261120
    %v51 = vsel %vm49, %v43, 0
    %v54 = vsel %vm49, %v44, 0
    %56 = vmatpush.msra.mxu0 0.0
    %57 = vmatpush.msra.mxu0 0.0
    %58 = vmatpush.msra.mxu0 0.0
    %59 = vmatpush.msra.mxu0 0.0
    %60 = vmatpush.msra.mxu0 0.0
    %61 = vmatpush.msra.mxu0 0.0
    %62 = vmatpush.msra.mxu0 0.0
    %63 = vmatpush.msra.mxu0 0.0
    %64 = vmatpush.msra.mxu0 0.0
    %65 = vmatpush.msra.mxu0 0.0
    %66 = vmatpush.msra.mxu0 0.0
    %67 = vmatpush.msra.mxu0 0.0
    %68 = vmatpush.msra.mxu0 %v48
    %69 = vmatpush.msra.mxu0 %v47
    %70 = vmatpush.msra.mxu0 %v46
    %71 = vmatpush.msra.mxu0 %v45
    %72 = vmatmul.f32.gmra.mxu0 %v51
    %v73 = vpop.f32.mrf.mxu0
    %v74 = vadd.f32 0.0, %v73
    %75 = vmatmul.f32.gmra.mxu0 %v54
    %v76 = vpop.f32.mrf.mxu0
    %v77 = vadd.f32 0.0, %v76
    %78 = vdwg.mxu0
    %79 = vmax.xlane.f32.xlu0 %v74
    %v80 = vpop.xlane.xlu0 %79
    %81 = vmax.xlane.f32.xlu0 %v77
    %v82 = vpop.xlane.xlu0 %81
    %v83 = vsub.f32 %v74, %v80
    %v84 = vsub.f32 %v77, %v82
    %v85 = vmul.f32 %v83, 1.442695
    %v86 = vpow.pop %v85
    %v87 = vmul.f32 %v84, 1.442695
    %v88 = vpow.pop %v87
    %v89 = vld [vmem:[%s3] sm:$0xff]
    %v90 = vld [vmem:[%s3 + $0x8] sm:$0xff]
    %v91 = vld [vmem:[%s3 + $0x10] sm:$0xff]
    %v92 = vld [vmem:[%s3 + $0x18] sm:$0xff]
    %v93 = vld [vmem:[%s3 + $0x20] sm:$0xff]
    %v94 = vld [vmem:[%s3 + $0x28] sm:$0xff]
    %v95 = vld [vmem:[%s3 + $0x30] sm:$0xff]
    %v96 = vld [vmem:[%s3 + $0x38] sm:$0xff]
    %v97 = vld [vmem:[%s3 + $0x40] sm:$0xff]
    %v98 = vld [vmem:[%s3 + $0x48] sm:$0xff]
    %v99 = vld [vmem:[%s3 + $0x50] sm:$0xff]
    %v100 = vld [vmem:[%s3 + $0x58] sm:$0xff]
    %v101 = vld [vmem:[%s3 + $0x60] sm:$0xff]
    %v102 = vld [vmem:[%s3 + $0x68] sm:$0xff]
    %v103 = vld [vmem:[%s3 + $0x70] sm:$0xff]
    %v104 = vld [vmem:[%s3 + $0x78] sm:$0xff]
    %105 = vmatpush.msra.mxu0 %v104
    %106 = vmatpush.msra.mxu0 %v103
    %107 = vmatpush.msra.mxu0 %v102
    %108 = vmatpush.msra.mxu0 %v101
    %109 = vmatpush.msra.mxu0 %v100
    %110 = vmatpush.msra.mxu0 %v99
    %111 = vmatpush.msra.mxu0 %v98
    %112 = vmatpush.msra.mxu0 %v97
    %113 = vmatpush.msra.mxu0 %v96
    %114 = vmatpush.msra.mxu0 %v95
    %115 = vmatpush.msra.mxu0 %v94
    %116 = vmatpush.msra.mxu0 %v93
    %117 = vmatpush.msra.mxu0 %v92
    %118 = vmatpush.msra.mxu0 %v91
    %119 = vmatpush.msra.mxu0 %v90
    %120 = vmatpush.msra.mxu0 %v89
    %121 = vmatmul.f32.gmra.mxu0 %v86
    %v122 = vpop.f32.mrf.mxu0
    %v123 = vadd.f32 0.0, %v122
    %124 = vmatmul.f32.gmra.mxu0 %v88
    %v125 = vpop.f32.mrf.mxu0
    %v126 = vadd.f32 0.0, %v125
    %127 = vdwg.mxu0
    %v128 = vmax.f32 %v123, 1e-30
    %v129 = vmax.f32 %v126, 1e-30
    %v130 = vrcp.pop %v128
    %v131 = vrcp.pop %v129
    %v132 = vmul.f32 %v86, %v130
    %v133 = vmul.f32 %v88, %v131
    %134 = vst [vmem:[#allocation6] sm:$0xff] %v132
    %135 = vst [vmem:[#allocation6 + $0x8] sm:$0xff] %v133
    %v136 = vld [vmem:[%s2] sm:$0xff]
    %v137 = vld [vmem:[%s2 + $0x8] sm:$0xff]
    %v138 = vld [vmem:[%s2 + $0x10] sm:$0xff]
    %v139 = vld [vmem:[%s2 + $0x18] sm:$0xff]
    %v140 = vld [vmem:[%s2 + $0x20] sm:$0xff]
    %v141 = vld [vmem:[%s2 + $0x28] sm:$0xff]
    %v142 = vld [vmem:[%s2 + $0x30] sm:$0xff]
    %v143 = vld [vmem:[%s2 + $0x38] sm:$0xff]
    %v144 = vld [vmem:[%s2 + $0x40] sm:$0xff]
    %v145 = vld [vmem:[%s2 + $0x48] sm:$0xff]
    %v146 = vld [vmem:[%s2 + $0x50] sm:$0xff]
    %v147 = vld [vmem:[%s2 + $0x58] sm:$0xff]
    %v148 = vld [vmem:[%s2 + $0x60] sm:$0xff]
    %v149 = vld [vmem:[%s2 + $0x68] sm:$0xff]
    %v150 = vld [vmem:[%s2 + $0x70] sm:$0xff]
    %v151 = vld [vmem:[%s2 + $0x78] sm:$0xff]
    %152 = vmatpush.msra.mxu0 %v151
    %153 = vmatpush.msra.mxu0 %v150
    %154 = vmatpush.msra.mxu0 %v149
    %155 = vmatpush.msra.mxu0 %v148
    %156 = vmatpush.msra.mxu0 %v147
    %157 = vmatpush.msra.mxu0 %v146
    %158 = vmatpush.msra.mxu0 %v145
    %159 = vmatpush.msra.mxu0 %v144
    %160 = vmatpush.msra.mxu0 %v143
    %161 = vmatpush.msra.mxu0 %v142
    %162 = vmatpush.msra.mxu0 %v141
    %163 = vmatpush.msra.mxu0 %v140
    %164 = vmatpush.msra.mxu0 %v139
    %165 = vmatpush.msra.mxu0 %v138
    %166 = vmatpush.msra.mxu0 %v137
    %167 = vmatpush.msra.mxu0 %v136
    %168 = vmatmul.f32.gmra.mxu0 %v132
    %v169 = vpop.f32.mrf.mxu0
    %v170 = vadd.f32 0.0, %v169
    %171 = vmatmul.f32.gmra.mxu0 %v133
    %v172 = vpop.f32.mrf.mxu0
    %v173 = vadd.f32 0.0, %v172
    %174 = vdwg.mxu0
    %v175 = vadd.f32 %v43, %v170
    %v176 = vadd.f32 %v44, %v173
    %v177 = vsel %vm49, %v175, 0.0
    %178 = vadd.xlane.f32.xlu0 %v177
    %v179 = vpop.xlane.xlu0 %178
    %v180 = vsel %vm49, %v176, 0.0
    %181 = vadd.xlane.f32.xlu0 %v180
    %v182 = vpop.xlane.xlu0 %181
    %v183 = vrcp.pop 32.0
    %v184 = vmul.f32 32.0, %v183
    %v185 = vsub.f32 1.0, %v184
    %v186 = vmul.f32 %v183, %v185
    %v187 = vadd.f32 %v183, %v186
    %vm188 = vweird.f32 %v183
    %v189 = vsel %vm188, %v183, %v187
    %v190 = vmul.f32 %v179, %v189
    %v191 = vmul.f32 %v182, %v189
    %v192 = vsub.f32 %v175, %v190
    %v193 = vsub.f32 %v176, %v191
    %v194 = vmul.f32 %v192, %v192
    %v195 = vmul.f32 %v193, %v193
    %v196 = vsel %vm49, %v194, 0.0
    %197 = vadd.xlane.f32.xlu0 %v196
    %v198 = vpop.xlane.xlu0 %197
    %v199 = vsel %vm49, %v195, 0.0
    %200 = vadd.xlane.f32.xlu0 %v199
    %v201 = vpop.xlane.xlu0 %200
    %v202 = vmul.f32 %v198, %v189
    %v203 = vmul.f32 %v201, %v189
    %v204 = vadd.f32 %v202, 1e-05
    %v205 = vadd.f32 %v203, 1e-05
    %v206 = vrsqrt.pop %v204
    %v207 = vmul.f32 %v206, %v204
    %v208 = vmul.f32 %v207, %v206
    %v209 = vmul.f32 0.5, %v208
    %v210 = vsub.f32 1.5, %v209
    %v211 = vmul.f32 %v206, %v210
    %vm212 = vweird.f32 %v204
    %vm213 = vweird.f32 %v206
    %vm214 = vmor %vm212, %vm213
    %v215 = vsel %vm214, %v206, %v211
    %v216 = vrsqrt.pop %v205
    %v217 = vmul.f32 %v216, %v205
    %v218 = vmul.f32 %v217, %v216
    %v219 = vmul.f32 0.5, %v218
    %v220 = vsub.f32 1.5, %v219
    %v221 = vmul.f32 %v216, %v220
    %vm222 = vweird.f32 %v205
    %vm223 = vweird.f32 %v216
    %vm224 = vmor %vm222, %vm223
    %v225 = vsel %vm224, %v216, %v221
    %v226 = vmul.f32 %v192, %v215
    %v227 = vmul.f32 %v193, %v225
    %v228 = vld [vmem:[%s4] sm:$0x1]
    %v230 = vperm.slane %v228, 0
    %v232 = vmul.f32 %v226, %v230
    %v233 = vmul.f32 %v227, %v230
    %v234 = vld [vmem:[%s5] sm:$0x1]
    %v236 = vperm.slane %v234, 0
    %v238 = vadd.f32 %v232, %v236
    %v239 = vadd.f32 %v233, %v236
    %240 = vst.msk [vmem:[#allocation5] sm:$0xff] %vm49, %v238
    %241 = vst.msk [vmem:[#allocation5 + $0x8] sm:$0xff] %vm49, %v239
    // Predicated region
    $region30: #{tpu_custom_call.1} parent=1 // pred_check
      _
    $region31: #{tpu_custom_call.1} parent=1 // pred_check_branch
      %243 = sbr.rel (0) target = $region33
    $region32: #{tpu_custom_call.1} parent=1 // pred_region
      %245 = vsyncadd [#allocation4], 0
      %s246 = sshll.u32 [#allocation5], 4
      %s247 = int_to_ptr.vmem [resolvable:$true] %s246
      %s248 = sshll.u32 %s6, 4
      %s249 = int_to_ptr.hbm [resolvable:$true] %s248
      %254 = dma.vmem_to_hbm [thread:$0]  %s247, 256, %s249, [#allocation4], 128, 128, 8
    $region33: #{tpu_custom_call.1} parent=1 // pred_fallthru
      _
    // Predicated region
    $region34: #{tpu_custom_call.1} parent=1 // pred_check
      _
    $region35: #{tpu_custom_call.1} parent=1 // pred_check_branch
      %256 = sbr.rel (0) target = $region37
    $region36: #{tpu_custom_call.1} parent=1 // pred_region
      %258 = vsyncadd [#allocation7], 0
      %s259 = sshll.u32 [#allocation6], 4
      %s260 = int_to_ptr.vmem [resolvable:$true] %s259
      %s261 = sshll.u32 %s7, 4
      %s262 = int_to_ptr.hbm [resolvable:$true] %s261
      %267 = dma.vmem_to_hbm [thread:$0]  %s260, 256, %s262, [#allocation7], 128, 128, 8
    $region37: #{tpu_custom_call.1} parent=1 // pred_fallthru
      _
    // Predicated region
    $region38: #{tpu_custom_call.1} parent=1 // pred_check
      _
    $region39: #{tpu_custom_call.1} parent=1 // pred_check_branch
      %269 = sbr.rel (0) target = $region41
    $region40: #{tpu_custom_call.1} parent=1 // pred_region
      %271 = dma.done [#allocation4], 256
    $region41: #{tpu_custom_call.1} parent=1 // pred_fallthru
      _
    // Predicated region
    $region42: #{tpu_custom_call.1} parent=1 // pred_check
      _
    $region43: #{tpu_custom_call.1} parent=1 // pred_check_branch
      %273 = sbr.rel (0) target = $region45
    $region44: #{tpu_custom_call.1} parent=1 // pred_region
      %275 = dma.done [#allocation7], 256
    $region45: #{tpu_custom_call.1} parent=1 // pred_fallthru
      _
    %276 = vsyncpa [#allocation3], 1
    %277 = vsyncpa [#allocation4], 1
    %278 = vsyncpa [#allocation7], 1

</llo_original>
